<compile_context>
chip_gen: v7x
topology: tpu7x:2x2x1
jax: 0.10.0
libtpu: 0.0.40
codegen_flags: <defaults>
</compile_context>

<pallas_src>
import functools
import math

import jax
import jax.numpy as jnp
from jax.experimental import pallas as pl
from jax.experimental.pallas import tpu as pltpu


# ----------------------------------------------------------------------------
# Kernel: out = X * factor + embeddings   (embeddings broadcast over batch)
# ----------------------------------------------------------------------------
def _add_embedding_kernel(x_ref, emb_ref, out_ref, *, factor):
    out_ref[...] = x_ref[...] * factor + emb_ref[...]


# ----------------------------------------------------------------------------
# Wrapper
# ----------------------------------------------------------------------------
def encoder_embedding(x, embeddings, factor=1.0):
    """x: (B, S, F), embeddings: (1, S, F) -> (B, S, F)."""
    B, S, F = x.shape
    assert embeddings.shape == (1, S, F)
    SF = S * F
    itemsize = jnp.dtype(x.dtype).itemsize
    kernel = functools.partial(_add_embedding_kernel, factor=float(factor))

    lane_dense = (SF % 128) == 0  # flatten only when it yields unmasked 128-lane stores

    # x + out + emb resident at once, comfortably inside every chip's scoped VMEM.
    total_bytes = (2 * B * SF + SF) * itemsize
    SMALL_LIMIT = 8 * 1024 * 1024  # 8 MiB — safe under v5e's 16 MiB scoped default

    # ---------------- small path: single un-pipelined VMEM-resident call -----
    if total_bytes <= SMALL_LIMIT:
        if lane_dense:
            x_in = x.reshape(B, SF)          # zero-copy, row-major contiguous
            emb_in = embeddings.reshape(1, SF)
            out_shape = jax.ShapeDtypeStruct((B, SF), x.dtype)
        else:
            x_in = x
            emb_in = embeddings
            out_shape = jax.ShapeDtypeStruct((B, S, F), x.dtype)

        out = pl.pallas_call(
            kernel,
            out_shape=out_shape,
            # No grid, no block_shape: whole arrays land in VMEM once, no
            # pipeline prologue/epilogue, no double-buffer allocation.
            in_specs=[
                pl.BlockSpec(memory_space=pltpu.MemorySpace.VMEM),
                pl.BlockSpec(memory_space=pltpu.MemorySpace.VMEM),
            ],
            out_specs=pl.BlockSpec(memory_space=pltpu.MemorySpace.VMEM),
        )(x_in, emb_in)
        return out.reshape(B, S, F)

    # ---------------- large path: tiled over batch at HBM roofline -----------
    # Tile budget: x-in (double-buffered) + out (double-buffered) + emb (once)
    # must stay under ~12 MiB so it fits v5e's 16 MiB scoped default and v7x's
    # 32 MiB scoped / 64 MiB physical VMEM with headroom.
    VMEM_BUDGET = 12 * 1024 * 1024
    row_bytes = SF * itemsize
    tb = (VMEM_BUDGET - row_bytes) // (4 * row_bytes)   # 4 = 2 bufs x (in + out)
    tb = max(8, min(int(tb), B, 1024))                  # 512-1024 rows ~ 85%+ roofline
    tb = (tb // 8) * 8                                  # sublane multiple of 8

    grid = (pl.cdiv(B, tb),)

    if lane_dense:
        x_in = x.reshape(B, SF)
        emb_in = embeddings.reshape(1, SF)
        out_shape = jax.ShapeDtypeStruct((B, SF), x.dtype)
        in_specs = [
            pl.BlockSpec((tb, SF), lambda i: (i, 0)),
            pl.BlockSpec((1, SF), lambda i: (0, 0)),   # constant map: emb DMA'd once
        ]
        out_specs = pl.BlockSpec((tb, SF), lambda i: (i, 0))
    else:
        x_in = x
        emb_in = embeddings
        out_shape = jax.ShapeDtypeStruct((B, S, F), x.dtype)
        in_specs = [
            pl.BlockSpec((tb, S, F), lambda i: (i, 0, 0)),
            pl.BlockSpec((1, S, F), lambda i: (0, 0, 0)),
        ]
        out_specs = pl.BlockSpec((tb, S, F), lambda i: (i, 0, 0))

    out = pl.pallas_call(
        kernel,
        out_shape=out_shape,
        grid=grid,
        in_specs=in_specs,
        out_specs=out_specs,
        compiler_params=pltpu.CompilerParams(
            # batch tiles are independent -> shard across v7x's 2 TensorCores
            dimension_semantics=("parallel",),
            vmem_limit_bytes=32 * 1024 * 1024,
        ),
    )(x_in, emb_in)
    return out.reshape(B, S, F)


# ----------------------------------------------------------------------------
if __name__ == "__main__":
    # Small shapes consistent with the module: batch=2, max_seq_len=8, fea_dim=32.
    B, S, F = 2, 8, 32

    key = jax.random.PRNGKey(0)
    k_emb, k_x = jax.random.split(key)

    # nn.init.xavier_uniform_ on a (1, S, F) tensor:
    #   fan_in = S * F, fan_out = 1 * F  ->  bound = sqrt(6 / (fan_in + fan_out))
    bound = math.sqrt(6.0 / (S * F + 1 * F))
    embeddings = jax.random.uniform(k_emb, (1, S, F), jnp.float32, -bound, bound)

    x = jax.random.normal(k_x, (B, S, F), dtype=jnp.float32)

    out = jax.block_until_ready(encoder_embedding(x, embeddings, factor=1.0))

    # Pure-JAX reference check of the forward semantics.
    ref = x * 1.0 + jnp.broadcast_to(embeddings, (B, S, F))
    assert out.shape == (B, S, F)
    assert bool(jnp.allclose(out, ref, atol=1e-6, rtol=1e-6)), "mismatch vs reference"

    print("KERNEL_OK")
</pallas_src>

<mosaic_0001>
module attributes {stable_mosaic.version = 11 : i64} {
  func.func @_add_embedding_kernel(%arg0: memref<2x256xf32, #tpu.memory_space<vmem>>, %arg1: memref<1x256xf32, #tpu.memory_space<vmem>>, %arg2: memref<2x256xf32, #tpu.memory_space<vmem>>) attributes {dimension_semantics = [], scalar_prefetch = 0 : i64, scratch_operands = 0 : i64, tpu.core_type = #tpu.core_type<tc>} {
    %c0 = arith.constant 0 : index
    %c0_0 = arith.constant 0 : index
    %0 = vector.load %arg0[%c0, %c0_0] : memref<2x256xf32, #tpu.memory_space<vmem>>, vector<2x256xf32>
    %cst = arith.constant 1.000000e+00 : f32
    %1 = vector.broadcast %cst : f32 to vector<2x256xf32>
    %2 = arith.mulf %0, %1 : vector<2x256xf32>
    %c0_1 = arith.constant 0 : index
    %c0_2 = arith.constant 0 : index
    %3 = vector.load %arg1[%c0_1, %c0_2] : memref<1x256xf32, #tpu.memory_space<vmem>>, vector<1x256xf32>
    %4 = vector.broadcast %3 : vector<1x256xf32> to vector<2x256xf32>
    %5 = arith.addf %2, %4 : vector<2x256xf32>
    %c0_3 = arith.constant 0 : index
    %c0_4 = arith.constant 0 : index
    %6 = vector.load %arg2[%c0_3, %c0_4] : memref<2x256xf32, #tpu.memory_space<vmem>>, vector<2x256xf32>
    tpu.vector_store %arg2[%c0_3, %c0_4], %5 {strides = array<i32>} : memref<2x256xf32, #tpu.memory_space<vmem>>, vector<2x256xf32>,
    return
  }
}

</mosaic_0001>

<llo_original>
// kernel: tpu_custom_call.1
$region0: #{tpu_custom_call.1}
  #allocation0 [shape = 'u32[]', space=smem, size = 0x4, offset = 0x4, fixed_abs, tag = 'smem constant byte address 0x4 - core index']
  #allocation1 [shape = 'u32[144,128]{1,0:T(1,128)}', space=vmem, size = 0x12000, scoped, tag = 'internal scratch']
  %s0 = inlined_call_operand.hbm [shape: f32[2,256], index: 0, kind: input, shape index: {}]
  %s1 = inlined_call_operand.vmem [shape: f32[1,256], index: 1, kind: input, shape index: {}]
  %s2 = inlined_call_operand.hbm [shape: f32[2,256], index: 2, kind: output, shape index: {}]
  %s3 = sld [smem:[#allocation0]]
  $region22: #{tpu_custom_call.1} parent=0
    _
  %s5 = ssub.s32 1, %s3
  %s6 = scalar_select 0, %s5, %s3
  $region1: #{tpu_custom_call.1} parent=0
    #allocation2 [shape = 'u8[2048]{0}', space=vmem, size = 0x800, scoped, tag = 'input window, operand 0, single buffered']
    #allocation3 [shape = 's32[1]{0}', space=sflag, size = 0x4, scoped, tag = 'scoped memory for tpu_custom_call.1']
    #allocation4 [shape = 's32[1]{0}', space=sflag, size = 0x4, scoped, tag = 'scoped memory for tpu_custom_call.1']
    #allocation5 [shape = 'u8[2048]{0}', space=vmem, size = 0x800, scoped, tag = 'output window, operand 0, single buffered']
    %7 = vsyncpa [#allocation3], 0
    %8 = vsyncpa [#allocation4], 0
    // Predicated region
    $region2: #{tpu_custom_call.1} parent=1 // pred_check
      _
    $region3: #{tpu_custom_call.1} parent=1 // pred_check_branch
      %10 = sbr.rel (0) target = $region5
    $region4: #{tpu_custom_call.1} parent=1 // pred_region
      %s12 = ssub.s32 64, 64
      %13 = vsyncadd [#allocation3], %s12
      %s15 = sshll.u32 [#allocation2], 4
      %s16 = int_to_ptr.vmem [resolvable:$true] %s15
      %18 = dma.hbm_to_vmem [thread:$0]  %s0, 64, %s16, [#allocation3]
    $region5: #{tpu_custom_call.1} parent=1 // pred_fallthru
      _
    // Predicated region
    $region6: #{tpu_custom_call.1} parent=1 // pred_check
      _
    $region7: #{tpu_custom_call.1} parent=1 // pred_check_branch
      %20 = sbr.rel (0) target = $region9
    $region8: #{tpu_custom_call.1} parent=1 // pred_region
      _
    $region9: #{tpu_custom_call.1} parent=1 // pred_fallthru
      _
    // Predicated region
    $region10: #{tpu_custom_call.1} parent=1 // pred_check
      _
    $region11: #{tpu_custom_call.1} parent=1 // pred_check_branch
      %22 = sbr.rel (0) target = $region13
    $region12: #{tpu_custom_call.1} parent=1 // pred_region
      %23 = dma.done [#allocation3], 64
    $region13: #{tpu_custom_call.1} parent=1 // pred_fallthru
      _
    %v24 = vld [vmem:[#allocation2] sm:$0xf]
    %v25 = vld [vmem:[%s1] sm:$0x3]
    %v27 = vlaneseq
    %v28 = vshrl.u32 %v27, 7
    %v29 = vsub.s32 0, %v28
    %v30 = vrot.slane %v25, %v29
    %v31 = vlaneseq
    %v32 = vshrl.u32 %v31, 7
    %v33 = vsub.s32 1, %v32
    %v34 = vrot.slane %v25, %v33
    %v35 = vcombine.low %v30, %v34
    %v37 = vunpack.c.l.s4 1983009808
    %v38 = vunpack.c.0.s8 %v37
    %v39 = vlaneseq
    %v40 = vshrl.u32 %v39, 7
    %v41 = vsub.s32 %v38, %v40
    %v42 = vrot.slane %v35, %v41
    %v44 = vadd.f32 %v24, %v42
    %45 = vst [vmem:[#allocation5] sm:$0xf] %v44
    // Predicated region
    $region14: #{tpu_custom_call.1} parent=1 // pred_check
      _
    $region15: #{tpu_custom_call.1} parent=1 // pred_check_branch
      %47 = sbr.rel (0) target = $region17
    $region16: #{tpu_custom_call.1} parent=1 // pred_region
      %s49 = ssub.s32 64, 64
      %50 = vsyncadd [#allocation4], %s49
      %s52 = sshll.u32 [#allocation5], 4
      %s53 = int_to_ptr.vmem [resolvable:$true] %s52
      %55 = dma.vmem_to_hbm [thread:$0]  %s53, 64, %s2, [#allocation4]
    $region17: #{tpu_custom_call.1} parent=1 // pred_fallthru
      _
    // Predicated region
    $region18: #{tpu_custom_call.1} parent=1 // pred_check
      _
    $region19: #{tpu_custom_call.1} parent=1 // pred_check_branch
      %57 = sbr.rel (0) target = $region21
    $region20: #{tpu_custom_call.1} parent=1 // pred_region
      %58 = dma.done [#allocation4], 64
    $region21: #{tpu_custom_call.1} parent=1 // pred_fallthru
      _
    %59 = vsyncpa [#allocation3], 1
    %60 = vsyncpa [#allocation4], 1

</llo_original>
